<compile_context>
chip_gen: v7x
topology: tpu7x:2x2x1
jax: 0.10.0
libtpu: 0.0.40
codegen_flags: <defaults>
</compile_context>

<pallas_src>
import jax
import jax.numpy as jnp
from jax.experimental import pallas as pl
from jax.experimental.pallas import tpu as pltpu

_LANES = 128


def _silu_kernel(x_ref, o_ref):
    # Compute in f32; exp on the EUP, divide via the EUP approx-reciprocal
    # slot (nearly free in the VLIW bundle).  For very negative x:
    # exp(-x) -> inf, recip -> 0, x * 0 -> -0.0 == silu(x) at f32 precision.
    x = x_ref[...].astype(jnp.float32)
    s = pl.reciprocal(1.0 + jnp.exp(-x), approx=True)
    o_ref[...] = (x * s).astype(o_ref.dtype)


def _tpu_generation() -> int:
    """Best-effort TPU generation from device_kind; 0 if unknown."""
    try:
        kind = jax.devices()[0].device_kind.lower()
    except Exception:
        return 0
    for gen in (7, 6, 5, 4, 3, 2):
        if f"v{gen}" in kind:
            return gen
    return 0


def _budget_for_gen(gen: int):
    """Returns (per-block byte budget, vmem_limit_bytes or None)."""
    if gen >= 7:
        # 2 buffers x (in + out) x 6 MiB = 24 MiB; raise scoped VMEM (64 MiB
        # physical on v7x) so big blocks amortize the ~0.35us/step overhead
        # against ~3.2 TB/s HBM.
        return 6 * 1024 * 1024, 48 << 20
    if gen == 6:
        # 128 MiB physical VMEM; 4 MiB blocks -> 16 MiB of buffers, lots of
        # headroom for Mosaic scratch / f32 intermediates.
        return 4 * 1024 * 1024, 48 << 20
    # v5e (16 MiB scoped default) / older / unknown: 2 MiB blocks -> 8 MiB of
    # double-buffered traffic fits the default limit; at ~820 GB/s the step
    # overhead is still <7% of the per-step HBM time.
    return 2 * 1024 * 1024, None


def silu_pallas(x: jax.Array) -> jax.Array:
    """Elementwise x * sigmoid(x) via a Pallas TPU kernel (any input shape)."""
    orig_shape = x.shape
    dtype = x.dtype
    n = x.size
    if n == 0:
        return x

    itemsize = jnp.dtype(dtype).itemsize
    # sublane packing: f32 -> 8, bf16/f16 -> 16, int8/fp8 -> 32
    sublane = {4: 8, 2: 16, 1: 32}.get(itemsize, 8)
    gen = _tpu_generation()
    block_bytes, vmem_limit = _budget_for_gen(gen)
    params = pltpu.CompilerParams(
        dimension_semantics=("parallel",), vmem_limit_bytes=vmem_limit)

    flat = x.reshape(-1)  # contiguous reshape: no data movement

    if n % _LANES == 0:
        # Main path: lane-dense (rows, 128) slab, no padding copy.  Every
        # block spans the full lane width so each block DMA is contiguous and
        # stores are long unmasked vst's.
        rows = n // _LANES
        block_rows = max(sublane, block_bytes // (_LANES * itemsize))
        block_rows = (block_rows // sublane) * sublane
        if block_rows >= rows:
            if gen >= 7 and rows > sublane:
                # Force >= 2 grid steps so the "parallel" axis can shard the
                # work across v7x's two TensorCores for mid-size inputs.
                block_rows = pl.cdiv(pl.cdiv(rows, 2), sublane) * sublane
            else:
                block_rows = rows  # full-extent block is always legal
        grid = (pl.cdiv(rows, block_rows),)
        x2d = flat.reshape(rows, _LANES)
        out = pl.pallas_call(
            _silu_kernel,
            out_shape=jax.ShapeDtypeStruct((rows, _LANES), dtype),
            grid_spec=pltpu.PrefetchScalarGridSpec(
                num_scalar_prefetch=0,
                grid=grid,
                in_specs=[pl.BlockSpec((block_rows, _LANES), lambda i: (i, 0))],
                out_specs=pl.BlockSpec((block_rows, _LANES), lambda i: (i, 0)),
            ),
            compiler_params=params,
        )(x2d)
        return out.reshape(orig_shape)

    # Ragged fallback (n not a multiple of 128): stay 1-D and let Pallas pad
    # the partial last block (masked store) -- no extra pad/slice HBM passes.
    chunk = sublane * _LANES
    block_elems = max(chunk, (block_bytes // itemsize) // chunk * chunk)
    if block_elems >= n:
        block_elems = n  # single full-extent block
    grid = (pl.cdiv(n, block_elems),)
    out = pl.pallas_call(
        _silu_kernel,
        out_shape=jax.ShapeDtypeStruct((n,), dtype),
        grid_spec=pltpu.PrefetchScalarGridSpec(
            num_scalar_prefetch=0,
            grid=grid,
            in_specs=[pl.BlockSpec((block_elems,), lambda i: (i,))],
            out_specs=pl.BlockSpec((block_elems,), lambda i: (i,)),
        ),
        compiler_params=params,
    )(flat)
    return out.reshape(orig_shape)


if __name__ == "__main__":
    key = jax.random.PRNGKey(0)
    # NCHW, as the PyTorch module would receive from a conv stack
    x = jax.random.normal(key, (2, 4, 16, 16), dtype=jnp.float32)

    y = silu_pallas(x)
    y = jax.block_until_ready(y)

    # Reference check.  Tolerance is loose because the kernel uses the EUP's
    # approximate reciprocal for the sigmoid divide (per perf review).
    y_ref = x * jax.nn.sigmoid(x)
    assert y.shape == x.shape and y.dtype == x.dtype
    assert jnp.allclose(y, y_ref, atol=1e-2, rtol=1e-2)

    print("KERNEL_OK")
</pallas_src>

<mosaic_0001>
module attributes {stable_mosaic.version = 11 : i64} {
  func.func @_silu_kernel(%arg0: i32, %arg1: memref<16x128xf32, #tpu.memory_space<vmem>>, %arg2: memref<16x128xf32, #tpu.memory_space<vmem>>) attributes {dimension_semantics = [#tpu.dimension_semantics<parallel>], iteration_bounds = array<i64: 1>, scalar_prefetch = 0 : i64, scratch_operands = 0 : i64, tpu.core_type = #tpu.core_type<tc>, window_params = [{transform_indices = @transform_0, window_bounds = array<i64: 16, 128>}, {transform_indices = @transform_1, window_bounds = array<i64: 16, 128>}]} {
    %c0 = arith.constant 0 : index
    %c0_0 = arith.constant 0 : index
    %0 = vector.load %arg1[%c0, %c0_0] : memref<16x128xf32, #tpu.memory_space<vmem>>, vector<16x128xf32>
    %cst = arith.constant 0.000000e+00 : f32
    %1 = vector.broadcast %cst : f32 to vector<16x128xf32>
    %2 = arith.subf %1, %0 : vector<16x128xf32>
    %3 = math.exp %2 : vector<16x128xf32>
    %cst_1 = arith.constant 1.000000e+00 : f32
    %4 = vector.broadcast %cst_1 : f32 to vector<16x128xf32>
    %5 = arith.addf %4, %3 : vector<16x128xf32>
    %6 = tpu.reciprocal %5 {approx = true} : vector<16x128xf32> -> vector<16x128xf32>
    %7 = arith.mulf %0, %6 : vector<16x128xf32>
    %c0_2 = arith.constant 0 : index
    %c0_3 = arith.constant 0 : index
    %8 = vector.load %arg2[%c0_2, %c0_3] : memref<16x128xf32, #tpu.memory_space<vmem>>, vector<16x128xf32>
    tpu.vector_store %arg2[%c0_2, %c0_3], %7 {strides = array<i32>} : memref<16x128xf32, #tpu.memory_space<vmem>>, vector<16x128xf32>,
    return
  }
  func.func @transform_0(%arg0: i32) -> (i32, i32) {
    %c0_i32 = arith.constant 0 : i32
    %c0_i32_0 = arith.constant 0 : i32
    return %arg0, %c0_i32 : i32, i32
  }
  func.func @transform_1(%arg0: i32) -> (i32, i32) {
    %c0_i32 = arith.constant 0 : i32
    %c0_i32_0 = arith.constant 0 : i32
    return %arg0, %c0_i32 : i32, i32
  }
}

</mosaic_0001>

<llo_original>
// kernel: tpu_custom_call.1
$region0: #{tpu_custom_call.1}
  #allocation0 [shape = 'u32[]', space=smem, size = 0x4, offset = 0x4, fixed_abs, tag = 'smem constant byte address 0x4 - core index']
  #allocation1 [shape = 'u32[144,128]{1,0:T(1,128)}', space=vmem, size = 0x12000, scoped, tag = 'internal scratch']
  %s0 = inlined_call_operand.hbm [shape: f32[16,128], index: 0, kind: input, shape index: {}]
  %s1 = inlined_call_operand.hbm [shape: f32[16,128], index: 1, kind: output, shape index: {}]
  %s2 = sld [smem:[#allocation0]]
  $region18: #{tpu_custom_call.1} parent=0
    _
  %s4 = ssub.s32 1, %s2
  %s5 = scalar_select 0, %s4, %s2
  $region1: #{tpu_custom_call.1} parent=0
    #allocation2 [shape = 'u8[8192]{0}', space=vmem, size = 0x2000, scoped, tag = 'input window, operand 0, single buffered']
    #allocation3 [shape = 's32[1]{0}', space=sflag, size = 0x4, scoped, tag = 'scoped memory for tpu_custom_call.1']
    #allocation4 [shape = 's32[1]{0}', space=sflag, size = 0x4, scoped, tag = 'scoped memory for tpu_custom_call.1']
    #allocation5 [shape = 'u8[8192]{0}', space=vmem, size = 0x2000, scoped, tag = 'output window, operand 0, single buffered']
    %6 = vsyncpa [#allocation3], 0
    %7 = vsyncpa [#allocation4], 0
    // Predicated region
    $region2: #{tpu_custom_call.1} parent=1 // pred_check
      _
    $region3: #{tpu_custom_call.1} parent=1 // pred_check_branch
      %9 = sbr.rel (0) target = $region5
    $region4: #{tpu_custom_call.1} parent=1 // pred_region
      %s11 = ssub.s32 256, 256
      %12 = vsyncadd [#allocation3], %s11
      %s13 = sshll.u32 [#allocation2], 4
      %s14 = int_to_ptr.vmem [resolvable:$true] %s13
      %19 = dma.hbm_to_vmem [thread:$0]  %s0, 256, %s14, [#allocation3], 128, 128, 8
    $region5: #{tpu_custom_call.1} parent=1 // pred_fallthru
      _
    // Predicated region
    $region6: #{tpu_custom_call.1} parent=1 // pred_check
      _
    $region7: #{tpu_custom_call.1} parent=1 // pred_check_branch
      %21 = sbr.rel (0) target = $region9
    $region8: #{tpu_custom_call.1} parent=1 // pred_region
      %22 = dma.done [#allocation3], 256
    $region9: #{tpu_custom_call.1} parent=1 // pred_fallthru
      _
    %v23 = vld [vmem:[#allocation2] sm:$0xff]
    %v24 = vld [vmem:[#allocation2 + $0x8] sm:$0xff]
    %v25 = vsub.f32 0.0, %v23
    %v26 = vsub.f32 0.0, %v24
    %v27 = vmul.f32 %v25, 1.442695
    %v28 = vpow.pop %v27
    %v29 = vmul.f32 %v26, 1.442695
    %v30 = vpow.pop %v29
    %v31 = vadd.f32 %v28, 1.0
    %v32 = vadd.f32 %v30, 1.0
    %v33 = vrcp.pop %v31
    %v34 = vrcp.pop %v32
    %v35 = vmul.f32 %v23, %v33
    %v36 = vmul.f32 %v24, %v34
    %37 = vst [vmem:[#allocation5] sm:$0xff] %v35
    %38 = vst [vmem:[#allocation5 + $0x8] sm:$0xff] %v36
    // Predicated region
    $region10: #{tpu_custom_call.1} parent=1 // pred_check
      _
    $region11: #{tpu_custom_call.1} parent=1 // pred_check_branch
      %40 = sbr.rel (0) target = $region13
    $region12: #{tpu_custom_call.1} parent=1 // pred_region
      %s42 = ssub.s32 256, 256
      %43 = vsyncadd [#allocation4], %s42
      %s44 = sshll.u32 [#allocation5], 4
      %s45 = int_to_ptr.vmem [resolvable:$true] %s44
      %50 = dma.vmem_to_hbm [thread:$0]  %s45, 256, %s1, [#allocation4], 128, 128, 8
    $region13: #{tpu_custom_call.1} parent=1 // pred_fallthru
      _
    // Predicated region
    $region14: #{tpu_custom_call.1} parent=1 // pred_check
      _
    $region15: #{tpu_custom_call.1} parent=1 // pred_check_branch
      %52 = sbr.rel (0) target = $region17
    $region16: #{tpu_custom_call.1} parent=1 // pred_region
      %53 = dma.done [#allocation4], 256
    $region17: #{tpu_custom_call.1} parent=1 // pred_fallthru
      _
    %54 = vsyncpa [#allocation3], 1
    %55 = vsyncpa [#allocation4], 1

</llo_original>
